<compile_context>
chip_gen: v6e
topology: v6e:2x2x1
jax: 0.10.0
libtpu: 0.0.40
codegen_flags: <defaults>
</compile_context>

<pallas_src>
import jax
import jax.numpy as jnp
from jax.experimental import pallas as pl
from jax.experimental.pallas import tpu as pltpu


def _round_up(x, m):
    return (x + m - 1) // m * m


def _device_kind():
    try:
        return jax.devices()[0].device_kind.lower()
    except Exception:
        return ""


def _vmem_capacity_bytes():
    """Physical VMEM size; fallback detects the chip instead of assuming 64 MiB."""
    try:
        info = pltpu.get_tpu_info()
        for attr in ("vmem_capacity_bytes", "vmem_bytes"):
            v = getattr(info, attr, None)
            if v:
                return int(v)
    except Exception:
        pass
    # v7x has 64 MiB VMEM per TensorCore; v5e/v6e have 128 MiB.
    return (64 if "v7" in _device_kind() else 128) * 1024 * 1024


def _mxu_align():
    """Feature-dim alignment: 256 on v6e/v7x (2x256x256 MXU), 128 elsewhere."""
    kind = _device_kind()
    return 256 if ("v6" in kind or "v7" in kind) else 128


def _pick_tiles(M, H_pad, F_pad, x_bytes, w_bytes, out_bytes, use_scratch, budget_bytes):
    """Largest (TM, TF) whose double-buffered tiles + temporaries fit the VMEM budget.

    TM is prioritized (weight reuse = HBM traffic lever); TF is restricted to divisors
    of F_pad so there is never padded-F waste or a partial reduction block.
    """
    tm_cap = _round_up(M, 8)
    tm_candidates = [t for t in (1024, 512, 256, 128, 64, 32, 16, 8) if t <= tm_cap] or [8]
    tf_candidates = [t for t in (2048, 1024, 512, 256, 128) if t <= F_pad and F_pad % t == 0]
    if not tf_candidates:
        tf_candidates = [F_pad]
    for tm in tm_candidates:
        for tf in tf_candidates:
            need = (
                2 * tm * H_pad * x_bytes                       # x tile (dbl-buffered)
                + 2 * H_pad * tf * w_bytes                     # w1 panel
                + 2 * tf * H_pad * w_bytes                     # w2 panel
                + 2 * (tf + H_pad) * 4                         # biases (f32)
                + 2 * tm * H_pad * out_bytes                   # output tile
                + (tm * H_pad * 4 if use_scratch else 0)       # f32 accumulator scratch
                + 2 * tm * tf * 4                              # f32 intermediate h (+ cast)
            )
            if need <= budget_bytes:
                return tm, tf
    return tm_candidates[-1], tf_candidates[-1]


def ffn_kernel_fused_out(x_ref, w1_ref, b1_ref, w2_ref, b2_ref, o_ref):
    """f32 output: accumulate the ffn reduction directly into the resident o_ref tile."""
    j = pl.program_id(1)

    @pl.when(j == 0)
    def _():
        o_ref[...] = jnp.zeros_like(o_ref)

    # layer1 panel: (TM, H) @ (H, TF) -> f32 accumulation on the MXU.
    h = jnp.dot(x_ref[...], w1_ref[...], preferred_element_type=jnp.float32)
    h = h + b1_ref[...]                                   # bias in f32
    # Exact GELU (erf formulation, matches torch.nn.GELU() default), f32 math.
    h = 0.5 * h * (1.0 + jax.lax.erf(h * 0.7071067811865476))
    # layer2 panel accumulate: cast activation to weight dtype (bf16) for the MXU.
    o_ref[...] += jnp.dot(h.astype(w2_ref.dtype), w2_ref[...],
                          preferred_element_type=jnp.float32)

    @pl.when(j == pl.num_programs(1) - 1)
    def _():
        o_ref[...] += b2_ref[...]


def ffn_kernel_scratch_acc(x_ref, w1_ref, b1_ref, w2_ref, b2_ref, o_ref, acc_ref):
    """Non-f32 output: accumulate in an f32 VMEM scratch, cast once at the end."""
    j = pl.program_id(1)

    @pl.when(j == 0)
    def _():
        acc_ref[...] = jnp.zeros_like(acc_ref)

    h = jnp.dot(x_ref[...], w1_ref[...], preferred_element_type=jnp.float32)
    h = h + b1_ref[...]
    h = 0.5 * h * (1.0 + jax.lax.erf(h * 0.7071067811865476))
    acc_ref[...] += jnp.dot(h.astype(w2_ref.dtype), w2_ref[...],
                            preferred_element_type=jnp.float32)

    @pl.when(j == pl.num_programs(1) - 1)
    def _():
        o_ref[...] = (acc_ref[...] + b2_ref[...]).astype(o_ref.dtype)


def prepare_ffn_params(w1, b1, w2, b2, *, compute_dtype=jnp.bfloat16, align=None):
    """Pad + cast parameters ONCE (outside the per-call hot path).

    Zero-padding is exact: gelu(0) == 0 and zero weight rows/cols contribute nothing.
    Weights are stored in the bf16 compute dtype; biases stay f32 (added in f32).
    """
    hidden, ffn = w1.shape
    if align is None:
        align = _mxu_align()
    H_pad = _round_up(hidden, align)
    F_pad = _round_up(ffn, align)
    w1_p = jnp.pad(w1, ((0, H_pad - hidden), (0, F_pad - ffn))).astype(compute_dtype)
    w2_p = jnp.pad(w2, ((0, F_pad - ffn), (0, H_pad - hidden))).astype(compute_dtype)
    b1_p = jnp.pad(b1, ((0, F_pad - ffn),)).reshape(1, F_pad).astype(jnp.float32)
    b2_p = jnp.pad(b2, ((0, H_pad - hidden),)).reshape(1, H_pad).astype(jnp.float32)
    return dict(w1=w1_p, b1=b1_p, w2=w2_p, b2=b2_p,
                hidden=hidden, ffn=ffn, H_pad=H_pad, F_pad=F_pad,
                compute_dtype=compute_dtype)


def ffn_forward(x, params):
    """x: (..., hidden). Returns same leading shape with hidden features."""
    hidden = params["hidden"]
    H_pad, F_pad = params["H_pad"], params["F_pad"]
    compute_dtype = params["compute_dtype"]
    assert x.shape[-1] == hidden
    lead = x.shape[:-1]
    out_dtype = x.dtype
    xm = x.reshape(-1, hidden)
    M = xm.shape[0]

    # f32 output => accumulate directly into o_ref (no scratch); otherwise f32 scratch.
    fuse_out = out_dtype == jnp.float32
    kernel_out_dtype = jnp.float32 if fuse_out else out_dtype

    x_bytes = jnp.dtype(compute_dtype).itemsize
    w_bytes = jnp.dtype(compute_dtype).itemsize
    out_bytes = jnp.dtype(kernel_out_dtype).itemsize

    vmem_bytes = _vmem_capacity_bytes()
    TM, TF = _pick_tiles(M, H_pad, F_pad, x_bytes, w_bytes, out_bytes,
                         use_scratch=not fuse_out,
                         budget_bytes=int(vmem_bytes * 0.6))

    # v7x megacore: guarantee >=2 blocks on the parallel token axis (both TensorCores
    # get work); never shrink TM below 256 for this reason alone.
    while _round_up(M, TM) // TM < 2 and TM >= 512:
        TM //= 2

    M_pad = _round_up(M, TM)
    grid = (M_pad // TM, F_pad // TF)
    num_i = M_pad // TM

    # Only the activation is padded per call (M rows + H lanes), then cast to bf16.
    xm_p = jnp.pad(xm, ((0, M_pad - M), (0, H_pad - hidden))).astype(compute_dtype)

    cost = pl.CostEstimate(
        flops=4 * M_pad * H_pad * F_pad,                       # two matmuls: 2*M*H*F each
        transcendentals=M_pad * F_pad,                         # erf per activation (advisory)
        bytes_accessed=(
            xm_p.size * x_bytes
            + num_i * (params["w1"].size + params["w2"].size) * w_bytes  # re-streamed per i
            + num_i * (params["b1"].size + params["b2"].size) * 4
            + M_pad * H_pad * out_bytes
        ),
    )

    kernel = ffn_kernel_fused_out if fuse_out else ffn_kernel_scratch_acc
    scratch_shapes = [] if fuse_out else [pltpu.VMEM((TM, H_pad), jnp.float32)]

    out = pl.pallas_call(
        kernel,
        out_shape=jax.ShapeDtypeStruct((M_pad, H_pad), kernel_out_dtype),
        grid_spec=pltpu.PrefetchScalarGridSpec(
            num_scalar_prefetch=0,
            grid=grid,
            in_specs=[
                pl.BlockSpec((TM, H_pad), lambda i, j: (i, 0)),    # x tile, resident over j
                pl.BlockSpec((H_pad, TF), lambda i, j: (0, j)),    # w1 panel
                pl.BlockSpec((1, TF), lambda i, j: (0, j)),        # b1 slice (f32)
                pl.BlockSpec((TF, H_pad), lambda i, j: (j, 0)),    # w2 panel
                pl.BlockSpec((1, H_pad), lambda i, j: (0, 0)),     # b2 (resident, f32)
            ],
            out_specs=pl.BlockSpec((TM, H_pad), lambda i, j: (i, 0)),
            scratch_shapes=scratch_shapes,
        ),
        compiler_params=pltpu.CompilerParams(
            dimension_semantics=("parallel", "arbitrary"),
            vmem_limit_bytes=int(min(vmem_bytes * 0.85, 112 * 1024 * 1024)),
        ),
        cost_estimate=cost,
    )(xm_p, params["w1"], params["b1"], params["w2"], params["b2"])

    out = out[:M, :hidden]
    if out.dtype != out_dtype:
        out = out.astype(out_dtype)
    return out.reshape(*lead, hidden)


def _ref_ffn(x, w1, b1, w2, b2):
    h = x @ w1 + b1
    h = jax.nn.gelu(h, approximate=False)   # torch.nn.GELU() default = exact erf
    return h @ w2 + b2


if __name__ == "__main__":
    # Module hyperparameters (dropout_rate is unused in the reference forward).
    batch, seq, hidden, ffn = 2, 8, 32, 64

    key = jax.random.PRNGKey(0)
    k_x, k_w1, k_b1, k_w2, k_b2 = jax.random.split(key, 5)

    x = jax.random.normal(k_x, (batch, seq, hidden), dtype=jnp.float32)

    # Deterministic synthetic parameter init (uniform, roughly torch.nn.Linear scale).
    lim1 = 1.0 / jnp.sqrt(hidden)
    lim2 = 1.0 / jnp.sqrt(ffn)
    w1 = jax.random.uniform(k_w1, (hidden, ffn), minval=-lim1, maxval=lim1, dtype=jnp.float32)
    b1 = jax.random.uniform(k_b1, (ffn,), minval=-lim1, maxval=lim1, dtype=jnp.float32)
    w2 = jax.random.uniform(k_w2, (ffn, hidden), minval=-lim2, maxval=lim2, dtype=jnp.float32)
    b2 = jax.random.uniform(k_b2, (hidden,), minval=-lim2, maxval=lim2, dtype=jnp.float32)

    # Pad + cast parameters once (outside the per-call hot path).
    params = prepare_ffn_params(w1, b1, w2, b2, compute_dtype=jnp.bfloat16)

    y = ffn_forward(x, params)
    y = jax.block_until_ready(y)

    y_ref = _ref_ffn(x, w1, b1, w2, b2)
    assert y.shape == (batch, seq, hidden)
    # bf16 MXU compute (f32 accumulation) vs all-f32 torch-equivalent reference.
    assert jnp.allclose(y, y_ref, atol=3e-2, rtol=3e-2)

    print("KERNEL_OK")
</pallas_src>

<mosaic_0001>
module attributes {stable_mosaic.version = 11 : i64} {
  func.func @ffn_kernel_fused_out(%arg0: i32, %arg1: i32, %arg2: memref<16x128xbf16, #tpu.memory_space<vmem>>, %arg3: memref<128x128xbf16, #tpu.memory_space<vmem>>, %arg4: memref<1x128xf32, #tpu.memory_space<vmem>>, %arg5: memref<128x128xbf16, #tpu.memory_space<vmem>>, %arg6: memref<1x128xf32, #tpu.memory_space<vmem>>, %arg7: memref<16x128xf32, #tpu.memory_space<vmem>>) attributes {dimension_semantics = [#tpu.dimension_semantics<parallel>, #tpu.dimension_semantics<arbitrary>], iteration_bounds = array<i64: 1, 1>, scalar_prefetch = 0 : i64, scratch_operands = 0 : i64, tpu.core_type = #tpu.core_type<tc>, window_params = [{transform_indices = @transform_0, window_bounds = array<i64: 16, 128>}, {transform_indices = @transform_1, window_bounds = array<i64: 128, 128>}, {transform_indices = @transform_2, window_bounds = array<i64: 1, 128>}, {transform_indices = @transform_3, window_bounds = array<i64: 128, 128>}, {pipeline_mode = #tpu.pipeline_mode<synchronous>, transform_indices = @transform_4, window_bounds = array<i64: 1, 128>}, {transform_indices = @transform_5, window_bounds = array<i64: 16, 128>}]} {
    %c0_i32 = arith.constant 0 : i32
    %0 = arith.cmpi eq, %arg1, %c0_i32 : i32
    %1 = arith.extui %0 : i1 to i32
    %c0_i32_0 = arith.constant 0 : i32
    %2 = arith.cmpi ne, %1, %c0_i32_0 : i32
    scf.if %2 {
      %cst_18 = arith.constant 0.000000e+00 : f32
      %26 = vector.broadcast %cst_18 : f32 to vector<16x128xf32>
      %c0_19 = arith.constant 0 : index
      %c0_20 = arith.constant 0 : index
      %27 = vector.load %arg7[%c0_19, %c0_20] : memref<16x128xf32, #tpu.memory_space<vmem>>, vector<16x128xf32>
      tpu.vector_store %arg7[%c0_19, %c0_20], %26 {strides = array<i32>} : memref<16x128xf32, #tpu.memory_space<vmem>>, vector<16x128xf32>,
    } else {
    }
    %c0 = arith.constant 0 : index
    %c0_1 = arith.constant 0 : index
    %3 = vector.load %arg2[%c0, %c0_1] : memref<16x128xbf16, #tpu.memory_space<vmem>>, vector<16x128xbf16>
    %c0_2 = arith.constant 0 : index
    %c0_3 = arith.constant 0 : index
    %4 = vector.load %arg3[%c0_2, %c0_3] : memref<128x128xbf16, #tpu.memory_space<vmem>>, vector<128x128xbf16>
    %cst = arith.constant dense<0.000000e+00> : vector<16x128xf32>
    %5 = tpu.matmul %3, %4, %cst {dimension_numbers = #tpu.dot_dimension_numbers<[1], [0], [0], [1], [0, 0, 1, 1], [], []>} : vector<16x128xbf16>, vector<128x128xbf16>, vector<16x128xf32> -> vector<16x128xf32>
    %c0_4 = arith.constant 0 : index
    %c0_5 = arith.constant 0 : index
    %6 = vector.load %arg4[%c0_4, %c0_5] : memref<1x128xf32, #tpu.memory_space<vmem>>, vector<1x128xf32>
    %7 = vector.broadcast %6 : vector<1x128xf32> to vector<16x128xf32>
    %8 = arith.addf %5, %7 : vector<16x128xf32>
    %cst_6 = arith.constant 5.000000e-01 : f32
    %9 = vector.broadcast %cst_6 : f32 to vector<16x128xf32>
    %10 = arith.mulf %9, %8 : vector<16x128xf32>
    %cst_7 = arith.constant 0.707106769 : f32
    %11 = vector.broadcast %cst_7 : f32 to vector<16x128xf32>
    %12 = arith.mulf %8, %11 : vector<16x128xf32>
    %13 = math.erf %12 : vector<16x128xf32>
    %cst_8 = arith.constant 1.000000e+00 : f32
    %14 = vector.broadcast %cst_8 : f32 to vector<16x128xf32>
    %15 = arith.addf %14, %13 : vector<16x128xf32>
    %16 = arith.mulf %10, %15 : vector<16x128xf32>
    %c0_9 = arith.constant 0 : index
    %c0_10 = arith.constant 0 : index
    %17 = vector.load %arg7[%c0_9, %c0_10] : memref<16x128xf32, #tpu.memory_space<vmem>>, vector<16x128xf32>
    %18 = arith.truncf %16 : vector<16x128xf32> to vector<16x128xbf16>
    %c0_11 = arith.constant 0 : index
    %c0_12 = arith.constant 0 : index
    %19 = vector.load %arg5[%c0_11, %c0_12] : memref<128x128xbf16, #tpu.memory_space<vmem>>, vector<128x128xbf16>
    %cst_13 = arith.constant dense<0.000000e+00> : vector<16x128xf32>
    %20 = tpu.matmul %18, %19, %cst_13 {dimension_numbers = #tpu.dot_dimension_numbers<[1], [0], [0], [1], [0, 0, 1, 1], [], []>} : vector<16x128xbf16>, vector<128x128xbf16>, vector<16x128xf32> -> vector<16x128xf32>
    %21 = arith.addf %17, %20 : vector<16x128xf32>
    %c0_14 = arith.constant 0 : index
    %c0_15 = arith.constant 0 : index
    %22 = vector.load %arg7[%c0_14, %c0_15] : memref<16x128xf32, #tpu.memory_space<vmem>>, vector<16x128xf32>
    tpu.vector_store %arg7[%c0_14, %c0_15], %21 {strides = array<i32>} : memref<16x128xf32, #tpu.memory_space<vmem>>, vector<16x128xf32>,
    %c0_i32_16 = arith.constant 0 : i32
    %23 = arith.cmpi eq, %arg1, %c0_i32_16 : i32
    %24 = arith.extui %23 : i1 to i32
    %c0_i32_17 = arith.constant 0 : i32
    %25 = arith.cmpi ne, %24, %c0_i32_17 : i32
    scf.if %25 {
      %c0_18 = arith.constant 0 : index
      %c0_19 = arith.constant 0 : index
      %26 = vector.load %arg7[%c0_18, %c0_19] : memref<16x128xf32, #tpu.memory_space<vmem>>, vector<16x128xf32>
      %c0_20 = arith.constant 0 : index
      %c0_21 = arith.constant 0 : index
      %27 = vector.load %arg6[%c0_20, %c0_21] : memref<1x128xf32, #tpu.memory_space<vmem>>, vector<1x128xf32>
      %28 = vector.broadcast %27 : vector<1x128xf32> to vector<16x128xf32>
      %29 = arith.addf %26, %28 : vector<16x128xf32>
      %c0_22 = arith.constant 0 : index
      %c0_23 = arith.constant 0 : index
      %30 = vector.load %arg7[%c0_22, %c0_23] : memref<16x128xf32, #tpu.memory_space<vmem>>, vector<16x128xf32>
      tpu.vector_store %arg7[%c0_22, %c0_23], %29 {strides = array<i32>} : memref<16x128xf32, #tpu.memory_space<vmem>>, vector<16x128xf32>,
    } else {
    }
    return
  }
  func.func @transform_0(%arg0: i32, %arg1: i32) -> (i32, i32) {
    %c0_i32 = arith.constant 0 : i32
    %c0_i32_0 = arith.constant 0 : i32
    return %arg0, %c0_i32 : i32, i32
  }
  func.func @transform_1(%arg0: i32, %arg1: i32) -> (i32, i32) {
    %c0_i32 = arith.constant 0 : i32
    %c0_i32_0 = arith.constant 0 : i32
    return %c0_i32, %arg1 : i32, i32
  }
  func.func @transform_2(%arg0: i32, %arg1: i32) -> (i32, i32) {
    %c0_i32 = arith.constant 0 : i32
    %c0_i32_0 = arith.constant 0 : i32
    return %c0_i32, %arg1 : i32, i32
  }
  func.func @transform_3(%arg0: i32, %arg1: i32) -> (i32, i32) {
    %c0_i32 = arith.constant 0 : i32
    %c0_i32_0 = arith.constant 0 : i32
    return %arg1, %c0_i32 : i32, i32
  }
  func.func @transform_4(%arg0: i32, %arg1: i32) -> (i32, i32) {
    %c0_i32 = arith.constant 0 : i32
    %c0_i32_0 = arith.constant 0 : i32
    %c0_i32_1 = arith.constant 0 : i32
    return %c0_i32, %c0_i32_0 : i32, i32
  }
  func.func @transform_5(%arg0: i32, %arg1: i32) -> (i32, i32) {
    %c0_i32 = arith.constant 0 : i32
    %c0_i32_0 = arith.constant 0 : i32
    return %arg0, %c0_i32 : i32, i32
  }
}

</mosaic_0001>

<llo_original>
// kernel: tpu_custom_call.1
$region0: #{tpu_custom_call.1}
  #allocation0 [shape = 'u32[]', space=smem, size = 0x4, offset = 0x4, fixed_abs, tag = 'smem constant byte address 0x4 - core index']
  #allocation1 [shape = 'u32[144,128]{1,0:T(1,128)}', space=vmem, size = 0x12000, scoped, tag = 'internal scratch']
  %s0 = inlined_call_operand.hbm [shape: bf16[16,128], index: 0, kind: input, shape index: {}]
  %s1 = inlined_call_operand.hbm [shape: bf16[128,128], index: 1, kind: input, shape index: {}]
  %s2 = inlined_call_operand.vmem [shape: f32[1,128], index: 2, kind: input, shape index: {}]
  %s3 = inlined_call_operand.hbm [shape: bf16[128,128], index: 3, kind: input, shape index: {}]
  %s4 = inlined_call_operand.vmem [shape: f32[1,128], index: 4, kind: input, shape index: {}]
  %s5 = inlined_call_operand.hbm [shape: f32[16,128], index: 5, kind: output, shape index: {}]
  %s6 = sld [smem:[#allocation0]]
  $region50: #{tpu_custom_call.1} parent=0
    _
  %s8 = ssub.s32 1, %s6
  %s9 = scalar_select 0, %s8, %s6
  $region1: #{tpu_custom_call.1} parent=0
    #allocation2 [shape = 'u8[4096]{0}', space=vmem, size = 0x1000, scoped, tag = 'input window, operand 0, single buffered']
    #allocation3 [shape = 's32[1]{0}', space=sflag, size = 0x4, scoped, tag = 'scoped memory for tpu_custom_call.1']
    #allocation4 [shape = 's32[1]{0}', space=sflag, size = 0x4, scoped, tag = 'scoped memory for tpu_custom_call.1']
    #allocation5 [shape = 'u8[32768]{0}', space=vmem, size = 0x8000, scoped, tag = 'input window, operand 1, single buffered']
    #allocation6 [shape = 's32[1]{0}', space=sflag, size = 0x4, scoped, tag = 'scoped memory for tpu_custom_call.1']
    #allocation7 [shape = 'u8[32768]{0}', space=vmem, size = 0x8000, scoped, tag = 'input window, operand 3, single buffered']
    #allocation8 [shape = 'u8[8192]{0}', space=vmem, size = 0x2000, scoped, tag = 'output window, operand 0, single buffered']
    %10 = vsyncpa [#allocation3], 0
    %11 = vsyncpa [#allocation6], 0
    %12 = vsyncpa [#allocation4], 0
    // Predicated region
    $region2: #{tpu_custom_call.1} parent=1 // pred_check
      _
    $region3: #{tpu_custom_call.1} parent=1 // pred_check_branch
      %14 = sbr.rel (0) target = $region5
    $region4: #{tpu_custom_call.1} parent=1 // pred_region
      %s16 = ssub.s32 128, 128
      %17 = vsyncadd [#allocation3], %s16
      %s18 = sshll.u32 [#allocation2], 4
      %s19 = int_to_ptr.vmem [resolvable:$true] %s18
      %24 = dma.hbm_to_vmem [thread:$0]  %s0, 128, %s19, [#allocation3], 64, 64, 4
    $region5: #{tpu_custom_call.1} parent=1 // pred_fallthru
      _
    // Predicated region
    $region6: #{tpu_custom_call.1} parent=1 // pred_check
      _
    $region7: #{tpu_custom_call.1} parent=1 // pred_check_branch
      %26 = sbr.rel (0) target = $region9
    $region8: #{tpu_custom_call.1} parent=1 // pred_region
      %s28 = ssub.s32 1024, 1024
      %29 = vsyncadd [#allocation6], %s28
      %s30 = sshll.u32 [#allocation5], 4
      %s31 = int_to_ptr.vmem [resolvable:$true] %s30
      %36 = dma.hbm_to_vmem [thread:$0]  %s1, 1024, %s31, [#allocation6], 64, 64, 4
    $region9: #{tpu_custom_call.1} parent=1 // pred_fallthru
      _
    // Predicated region
    $region10: #{tpu_custom_call.1} parent=1 // pred_check
      _
    $region11: #{tpu_custom_call.1} parent=1 // pred_check_branch
      %38 = sbr.rel (0) target = $region13
    $region12: #{tpu_custom_call.1} parent=1 // pred_region
      _
    $region13: #{tpu_custom_call.1} parent=1 // pred_fallthru
      _
    // Predicated region
    $region14: #{tpu_custom_call.1} parent=1 // pred_check
      _
    $region15: #{tpu_custom_call.1} parent=1 // pred_check_branch
      %40 = sbr.rel (0) target = $region17
    $region16: #{tpu_custom_call.1} parent=1 // pred_region
      %s42 = ssub.s32 1024, 1024
      %43 = vsyncadd [#allocation6], %s42
      %s44 = sshll.u32 [#allocation7], 4
      %s45 = int_to_ptr.vmem [resolvable:$true] %s44
      %50 = dma.hbm_to_vmem [thread:$0]  %s3, 1024, %s45, [#allocation6], 64, 64, 4
    $region17: #{tpu_custom_call.1} parent=1 // pred_fallthru
      _
    // Predicated region
    $region18: #{tpu_custom_call.1} parent=1 // pred_check
      _
    $region19: #{tpu_custom_call.1} parent=1 // pred_check_branch
      %52 = sbr.rel (0) target = $region21
    $region20: #{tpu_custom_call.1} parent=1 // pred_region
      _
    $region21: #{tpu_custom_call.1} parent=1 // pred_fallthru
      _
    // Predicated region
    $region22: #{tpu_custom_call.1} parent=1 // pred_check
      _
    $region23: #{tpu_custom_call.1} parent=1 // pred_check_branch
      %54 = sbr.rel (0) target = $region25
    $region24: #{tpu_custom_call.1} parent=1 // pred_region
      %55 = dma.done [#allocation3], 128
    $region25: #{tpu_custom_call.1} parent=1 // pred_fallthru
      _
    // Predicated region
    $region26: #{tpu_custom_call.1} parent=1 // pred_check
      _
    $region27: #{tpu_custom_call.1} parent=1 // pred_check_branch
      %57 = sbr.rel (0) target = $region29
    $region28: #{tpu_custom_call.1} parent=1 // pred_region
      %58 = dma.done [#allocation6], 1024
    $region29: #{tpu_custom_call.1} parent=1 // pred_fallthru
      _
    // Predicated region
    $region30: #{tpu_custom_call.1} parent=1 // pred_check
      _
    $region31: #{tpu_custom_call.1} parent=1 // pred_check_branch
      %60 = sbr.rel (0) target = $region33
    $region32: #{tpu_custom_call.1} parent=1 // pred_region
      %61 = dma.done [#allocation6], 1024
    $region33: #{tpu_custom_call.1} parent=1 // pred_fallthru
      _
    %p63 = scmp.eq.s32.totalorder 0, 0
    // Predicated region
    $region34: #{tpu_custom_call.1} parent=1 // pred_check
      %p64 = pneg %p63
    $region35: #{tpu_custom_call.1} parent=1 // pred_check_branch
      %66 = sbr.rel (%p64) target = $region37
    $region36: #{tpu_custom_call.1} parent=1 // pred_region
      %67 = vst [vmem:[#allocation8] sm:$0xff] 0.0
      %68 = vst [vmem:[#allocation8 + $0x8] sm:$0xff] 0.0
    $region37: #{tpu_custom_call.1} parent=1 // pred_fallthru
      _
    %v69 = vld [vmem:[#allocation2] sm:$0xf]
    %v70 = vld [vmem:[#allocation2 + $0x4] sm:$0xf]
    %v71 = vld [vmem:[#allocation5] sm:$0xf]
    %v72 = vld [vmem:[#allocation5 + $0x4] sm:$0xf]
    %v73 = vld [vmem:[#allocation5 + $0x8] sm:$0xf]
    %v74 = vld [vmem:[#allocation5 + $0xc] sm:$0xf]
    %v75 = vld [vmem:[#allocation5 + $0x10] sm:$0xf]
    %v76 = vld [vmem:[#allocation5 + $0x14] sm:$0xf]
    %v77 = vld [vmem:[#allocation5 + $0x18] sm:$0xf]
    %v78 = vld [vmem:[#allocation5 + $0x1c] sm:$0xf]
    %v79 = vld [vmem:[#allocation5 + $0x20] sm:$0xf]
    %v80 = vld [vmem:[#allocation5 + $0x24] sm:$0xf]
    %v81 = vld [vmem:[#allocation5 + $0x28] sm:$0xf]
    %v82 = vld [vmem:[#allocation5 + $0x2c] sm:$0xf]
    %v83 = vld [vmem:[#allocation5 + $0x30] sm:$0xf]
    %v84 = vld [vmem:[#allocation5 + $0x34] sm:$0xf]
    %v85 = vld [vmem:[#allocation5 + $0x38] sm:$0xf]
    %v86 = vld [vmem:[#allocation5 + $0x3c] sm:$0xf]
    %v87 = vld [vmem:[%s2] sm:$0x1]
    %v89 = vlaneseq
    %v90 = vshrl.u32 %v89, 7
    %v91 = vsub.s32 0, %v90
    %v92 = vrot.slane %v87, %v91
    %v96 = vunpack.c.l.b16 %v69
    %v97 = vunpack.c.l.b16 %v70
    %v98 = vpack.c.b16 %v97, %v96
    %v116 = vunpack.c.l.b16 %v71
    %v117 = vunpack.c.l.b16 %v72
    %v118 = vunpack.c.l.b16 %v73
    %v119 = vunpack.c.l.b16 %v74
    %v120 = vunpack.c.l.b16 %v75
    %v121 = vunpack.c.l.b16 %v76
    %v122 = vunpack.c.l.b16 %v77
    %v123 = vunpack.c.l.b16 %v78
    %v124 = vunpack.c.l.b16 %v79
    %v125 = vunpack.c.l.b16 %v80
    %v126 = vunpack.c.l.b16 %v81
    %v127 = vunpack.c.l.b16 %v82
    %v128 = vunpack.c.l.b16 %v83
    %v129 = vunpack.c.l.b16 %v84
    %v130 = vunpack.c.l.b16 %v85
    %v131 = vunpack.c.l.b16 %v86
    %v132 = vpack.c.b16 %v117, %v116
    %v133 = vpack.c.b16 %v119, %v118
    %v134 = vpack.c.b16 %v121, %v120
    %v135 = vpack.c.b16 %v123, %v122
    %v136 = vpack.c.b16 %v125, %v124
    %v137 = vpack.c.b16 %v127, %v126
    %v138 = vpack.c.b16 %v129, %v128
    %v139 = vpack.c.b16 %v131, %v130
    %148 = vmatprep.subr.bf16.mxu0 0
    %149 = vmatpush1.bf16.msra.mxu0 %v139
    %150 = vmatprep.subr.bf16.mxu0 0
    %151 = vmatpush1.bf16.msra.mxu0 %v138
    %152 = vmatprep.subr.bf16.mxu0 0
    %153 = vmatpush1.bf16.msra.mxu0 %v137
    %154 = vmatprep.subr.bf16.mxu0 0
    %155 = vmatpush1.bf16.msra.mxu0 %v136
    %156 = vmatprep.subr.bf16.mxu0 0
    %157 = vmatpush1.bf16.msra.mxu0 %v135
    %158 = vmatprep.subr.bf16.mxu0 0
    %159 = vmatpush1.bf16.msra.mxu0 %v134
    %160 = vmatprep.subr.bf16.mxu0 0
    %161 = vmatpush1.bf16.msra.mxu0 %v133
    %162 = vmatprep.subr.bf16.mxu0 0
    %163 = vmatpush1.bf16.msra.mxu0 %v132
    %164 = vmatprep.subr.bf16.mxu0 0
    %165 = vmatpush2.bf16.msra.mxu0 0
    %166 = vmatprep.subr.bf16.mxu0 0
    %167 = vmatpush2.bf16.msra.mxu0 0
    %168 = vmatprep.subr.bf16.mxu0 0
    %169 = vmatpush2.bf16.msra.mxu0 0
    %170 = vmatprep.subr.bf16.mxu0 0
    %171 = vmatpush2.bf16.msra.mxu0 0
    %172 = vmatprep.subr.bf16.mxu0 0
    %173 = vmatpush2.bf16.msra.mxu0 0
    %174 = vmatprep.subr.bf16.mxu0 0
    %175 = vmatpush2.bf16.msra.mxu0 0
    %176 = vmatprep.subr.bf16.mxu0 0
    %177 = vmatpush2.bf16.msra.mxu0 0
    %178 = vmatprep.subr.bf16.mxu0 0
    %179 = vmatpush2.bf16.msra.mxu0 0
    %180 = vmatprep.mubr.bf16.mxu0 0
    %181 = vmatmul.mubr.bf16.gmra.mxu0 %v98
    %v182 = vpop.f32.mrf.mxu0
    %v183 = vadd.f32 %v92, %v182
    %v184 = vpop.f32.mrf.mxu0
    %v185 = vpop.f32.mrf.mxu0
    %v186 = vadd.f32 %v92, %v185
    %v187 = vpop.f32.mrf.mxu0
    %188 = vdwg.mxu0
    %v189 = vmul.f32 %v183, 0.5
    %v190 = vmul.f32 %v186, 0.5
    %v191 = vmul.f32 %v183, 0.70710677
    %v192 = vmul.f32 %v186, 0.70710677
    %v193 = verf.f32.pop %v191
    %v194 = verf.f32.pop %v192
    %v195 = vadd.f32 %v193, 1.0
    %v196 = vadd.f32 %v194, 1.0
    %v197 = vmul.f32 %v189, %v195
    %v198 = vmul.f32 %v190, %v196
    %v199 = vld [vmem:[#allocation8] sm:$0xff]
    %v200 = vld [vmem:[#allocation8 + $0x8] sm:$0xff]
    %v201 = vpack.c.bf16 %v198, %v197
    %v202 = vld [vmem:[#allocation7] sm:$0xf]
    %v203 = vld [vmem:[#allocation7 + $0x4] sm:$0xf]
    %v204 = vld [vmem:[#allocation7 + $0x8] sm:$0xf]
    %v205 = vld [vmem:[#allocation7 + $0xc] sm:$0xf]
    %v206 = vld [vmem:[#allocation7 + $0x10] sm:$0xf]
    %v207 = vld [vmem:[#allocation7 + $0x14] sm:$0xf]
    %v208 = vld [vmem:[#allocation7 + $0x18] sm:$0xf]
    %v209 = vld [vmem:[#allocation7 + $0x1c] sm:$0xf]
    %v210 = vld [vmem:[#allocation7 + $0x20] sm:$0xf]
    %v211 = vld [vmem:[#allocation7 + $0x24] sm:$0xf]
    %v212 = vld [vmem:[#allocation7 + $0x28] sm:$0xf]
    %v213 = vld [vmem:[#allocation7 + $0x2c] sm:$0xf]
    %v214 = vld [vmem:[#allocation7 + $0x30] sm:$0xf]
    %v215 = vld [vmem:[#allocation7 + $0x34] sm:$0xf]
    %v216 = vld [vmem:[#allocation7 + $0x38] sm:$0xf]
    %v217 = vld [vmem:[#allocation7 + $0x3c] sm:$0xf]
    %v234 = vunpack.c.l.b16 %v202
    %v235 = vunpack.c.l.b16 %v203
    %v236 = vunpack.c.l.b16 %v204
    %v237 = vunpack.c.l.b16 %v205
    %v238 = vunpack.c.l.b16 %v206
    %v239 = vunpack.c.l.b16 %v207
    %v240 = vunpack.c.l.b16 %v208
    %v241 = vunpack.c.l.b16 %v209
    %v242 = vunpack.c.l.b16 %v210
    %v243 = vunpack.c.l.b16 %v211
    %v244 = vunpack.c.l.b16 %v212
    %v245 = vunpack.c.l.b16 %v213
    %v246 = vunpack.c.l.b16 %v214
    %v247 = vunpack.c.l.b16 %v215
    %v248 = vunpack.c.l.b16 %v216
    %v249 = vunpack.c.l.b16 %v217
    %v250 = vpack.c.b16 %v235, %v234
    %v251 = vpack.c.b16 %v237, %v236
    %v252 = vpack.c.b16 %v239, %v238
    %v253 = vpack.c.b16 %v241, %v240
    %v254 = vpack.c.b16 %v243, %v242
    %v255 = vpack.c.b16 %v245, %v244
    %v256 = vpack.c.b16 %v247, %v246
    %v257 = vpack.c.b16 %v249, %v248
    %266 = vmatprep.subr.bf16.mxu0 0
    %267 = vmatpush1.bf16.msra.mxu0 %v257
    %268 = vmatprep.subr.bf16.mxu0 0
    %269 = vmatpush1.bf16.msra.mxu0 %v256
    %270 = vmatprep.subr.bf16.mxu0 0
    %271 = vmatpush1.bf16.msra.mxu0 %v255
    %272 = vmatprep.subr.bf16.mxu0 0
    %273 = vmatpush1.bf16.msra.mxu0 %v254
    %274 = vmatprep.subr.bf16.mxu0 0
    %275 = vmatpush1.bf16.msra.mxu0 %v253
    %276 = vmatprep.subr.bf16.mxu0 0
    %277 = vmatpush1.bf16.msra.mxu0 %v252
    %278 = vmatprep.subr.bf16.mxu0 0
    %279 = vmatpush1.bf16.msra.mxu0 %v251
    %280 = vmatprep.subr.bf16.mxu0 0
    %281 = vmatpush1.bf16.msra.mxu0 %v250
    %282 = vmatprep.subr.bf16.mxu0 0
    %283 = vmatpush2.bf16.msra.mxu0 0
    %284 = vmatprep.subr.bf16.mxu0 0
    %285 = vmatpush2.bf16.msra.mxu0 0
    %286 = vmatprep.subr.bf16.mxu0 0
    %287 = vmatpush2.bf16.msra.mxu0 0
    %288 = vmatprep.subr.bf16.mxu0 0
    %289 = vmatpush2.bf16.msra.mxu0 0
    %290 = vmatprep.subr.bf16.mxu0 0
    %291 = vmatpush2.bf16.msra.mxu0 0
    %292 = vmatprep.subr.bf16.mxu0 0
    %293 = vmatpush2.bf16.msra.mxu0 0
    %294 = vmatprep.subr.bf16.mxu0 0
    %295 = vmatpush2.bf16.msra.mxu0 0
    %296 = vmatprep.subr.bf16.mxu0 0
    %297 = vmatpush2.bf16.msra.mxu0 0
    %298 = vmatprep.mubr.bf16.mxu0 0
    %299 = vmatmul.mubr.bf16.gmra.mxu0 %v201
    %v300 = vpop.f32.mrf.mxu0
    %v301 = vadd.f32 0.0, %v300
    %v302 = vpop.f32.mrf.mxu0
    %v303 = vpop.f32.mrf.mxu0
    %v304 = vadd.f32 0.0, %v303
    %v305 = vpop.f32.mrf.mxu0
    %306 = vdwg.mxu0
    %v307 = vadd.f32 %v199, %v301
    %v308 = vadd.f32 %v200, %v304
    %309 = vst [vmem:[#allocation8] sm:$0xff] %v307
    %310 = vst [vmem:[#allocation8 + $0x8] sm:$0xff] %v308
    // Predicated region
    $region38: #{tpu_custom_call.1} parent=1 // pred_check
      %p311 = pneg %p63
    $region39: #{tpu_custom_call.1} parent=1 // pred_check_branch
      %313 = sbr.rel (%p311) target = $region41
    $region40: #{tpu_custom_call.1} parent=1 // pred_region
      %v314 = vld [vmem:[#allocation8] sm:$0xff]
      %v315 = vld [vmem:[#allocation8 + $0x8] sm:$0xff]
      %v316 = vld [vmem:[%s4] sm:$0x1]
      %v318 = vlaneseq
      %v319 = vshrl.u32 %v318, 7
      %v320 = vsub.s32 0, %v319
      %v321 = vrot.slane %v316, %v320
      %v323 = vadd.f32 %v314, %v321
      %v324 = vadd.f32 %v315, %v321
      %325 = vst [vmem:[#allocation8] sm:$0xff] %v323
      %326 = vst [vmem:[#allocation8 + $0x8] sm:$0xff] %v324
    $region41: #{tpu_custom_call.1} parent=1 // pred_fallthru
      _
    // Predicated region
    $region42: #{tpu_custom_call.1} parent=1 // pred_check
      _
    $region43: #{tpu_custom_call.1} parent=1 // pred_check_branch
      %328 = sbr.rel (0) target = $region45
    $region44: #{tpu_custom_call.1} parent=1 // pred_region
      %s330 = ssub.s32 256, 256
      %331 = vsyncadd [#allocation4], %s330
      %s332 = sshll.u32 [#allocation8], 4
      %s333 = int_to_ptr.vmem [resolvable:$true] %s332
      %338 = dma.vmem_to_hbm [thread:$0]  %s333, 256, %s5, [#allocation4], 128, 128, 8
    $region45: #{tpu_custom_call.1} parent=1 // pred_fallthru
      _
    // Predicated region
    $region46: #{tpu_custom_call.1} parent=1 // pred_check
      _
    $region47: #{tpu_custom_call.1} parent=1 // pred_check_branch
      %340 = sbr.rel (0) target = $region49
    $region48: #{tpu_custom_call.1} parent=1 // pred_region
      %341 = dma.done [#allocation4], 256
    $region49: #{tpu_custom_call.1} parent=1 // pred_fallthru
      _
    %342 = vsyncpa [#allocation3], 1
    %343 = vsyncpa [#allocation6], 1
    %344 = vsyncpa [#allocation4], 1

</llo_original>
